<compile_context>
chip_gen: v5e
topology: v5e:2x2
jax: 0.10.0
libtpu: 0.0.40
codegen_flags: <defaults>
</compile_context>

<pallas_src>
import numpy as np
import jax
import jax.numpy as jnp
from jax import lax
from jax.experimental import pallas as pl
from jax.experimental.pallas import tpu as pltpu


# -----------------------------------------------------------------------------
# Pass 1: conv3x3 -> ReLU -> conv3x3 (+bias), fully channels-major (C, H*W).
# Per batch element emits
#   y     : (no, H*W)  pre-BN conv output (lane-dense)
#   stats : (no, 2)    per-sample [sum, sum_of_squares] over pixels (for BN)
# -----------------------------------------------------------------------------
def _make_pass1_kernel(H, W, ni, bottle, no):
    HW = H * W
    P = W + 1            # zero pad (lanes) on each side; covers dr = +-1 row shifts
    HWP = HW + 2 * P

    def im2col(flat, cmask_ref):
        # flat: (C, HW) bf16 -> (9*C, HW) bf16, rows ordered [tap, channel].
        # Each 3x3 tap is a static lane-slice of the zero-padded flat row; the
        # row-boundary out-of-range reads land in the zero pad, and the column
        # wrap-around reads are killed by pre-masking the source columns.
        C = flat.shape[0]
        zpad = jnp.zeros((C, P), jnp.bfloat16)
        fc = jnp.concatenate([zpad, flat, zpad], axis=1)          # (C, HWP)
        fl = fc * cmask_ref[0:1, :]   # source col W-1 zeroed (used by dc=-1 taps)
        fr = fc * cmask_ref[1:2, :]   # source col 0   zeroed (used by dc=+1 taps)
        cols = []
        for kh in range(3):
            for kw in range(3):
                off = (kh - 1) * W + (kw - 1)
                src = fl if kw == 0 else (fr if kw == 2 else fc)
                cols.append(src[:, P + off: P + off + HW])        # (C, HW)
        return jnp.concatenate(cols, axis=0)                      # (9*C, HW)

    def kernel(x_ref, cmask_ref, w1t_ref, b1_ref, w2t_ref, b2_ref,
               y_ref, stats_ref):
        # ---- conv1: single matmul, K = 9*ni, bf16 operands / f32 accumulate ----
        x = x_ref[0].astype(jnp.bfloat16)                         # (ni, HW)
        cols1 = im2col(x, cmask_ref)                              # (9*ni, HW) bf16
        h1 = jnp.dot(w1t_ref[...], cols1,
                     preferred_element_type=jnp.float32) + b1_ref[...]   # (bottle, HW)
        h1 = jnp.maximum(h1, 0.0).astype(jnp.bfloat16)            # ReLU -> bf16

        # ---- conv2: single matmul, K = 9*bottle ----
        cols2 = im2col(h1, cmask_ref)                             # (9*bottle, HW) bf16
        y = jnp.dot(w2t_ref[...], cols2,
                    preferred_element_type=jnp.float32) + b2_ref[...]    # (no, HW) f32

        # Lane-dense store (HW lanes) + one-pass BN partial statistics (f32).
        # TODO(synk): y could be stored in bf16 to cut HBM traffic ~33%; kept
        # f32 so the BN normalization input matches the f32 reference closely.
        y_ref[0] = y
        s = jnp.sum(y, axis=1, keepdims=True)                     # (no, 1)
        ss = jnp.sum(y * y, axis=1, keepdims=True)                # (no, 1)
        stats_ref[0] = jnp.concatenate([s, ss], axis=1)           # (no, 2)

    return kernel


# -----------------------------------------------------------------------------
# Pass 2: streaming BN affine (precomputed scale/shift) + residual + CELU,
# channels-major (C, H*W).  Output is directly NCHW (flattened spatial).
# -----------------------------------------------------------------------------
def _make_pass2_kernel(ni, no, use_proj):
    def kernel(*refs):
        if use_proj:
            scale_ref, shift_ref, y_ref, x_ref, wm_ref, bm_ref, out_ref = refs
        else:
            scale_ref, shift_ref, y_ref, x_ref, out_ref = refs

        y_bn = y_ref[0] * scale_ref[...] + shift_ref[...]         # (no, HW)
        x = x_ref[0]                                              # (ni, HW) f32

        if use_proj:                      # no < ni : 1x1 conv projection
            res = jnp.dot(wm_ref[...], x.astype(jnp.bfloat16),
                          preferred_element_type=jnp.float32) + bm_ref[...]
        elif no > ni:                     # channel zero-pad (no HBM copy)
            hw = x.shape[-1]
            res = jnp.concatenate(
                [x, jnp.zeros((no - ni, hw), jnp.float32)], axis=0)
        else:                             # no == ni : identity
            res = x

        z = res + y_bn                                            # add
        out_ref[0] = jnp.where(z > 0.0, z,
                               jnp.exp(jnp.minimum(z, 0.0)) - 1.0)  # CELU(1)

    return kernel


def resblock_pallas(x_nchw, params, eps=1e-5):
    """Pallas ResBlock forward. x_nchw: (N, ni, H, W) float32 -> (N, no, H, W)."""
    N, ni, H, W = x_nchw.shape
    bottle = params["w1"].shape[-1]
    no = params["w2"].shape[-1]
    use_proj = no < ni
    HW = H * W
    P = W + 1
    HWP = HW + 2 * P

    # Free reshape (contiguous trailing-dim collapse): NCHW is already
    # channels-major, so no host transpose / pad pass is needed.
    x_flat = x_nchw.astype(jnp.float32).reshape(N, ni, HW)

    # Static column-boundary masks for the im2col taps (tiny, built on host).
    col = np.arange(HW) % W
    m = np.ones((2, HWP), np.float32)
    m[0, P:P + HW] = (col != W - 1).astype(np.float32)   # dc = -1 taps
    m[1, P:P + HW] = (col != 0).astype(np.float32)       # dc = +1 taps
    cmask = jnp.asarray(m, dtype=jnp.bfloat16)

    # Conv weights pre-transposed to the channels-major matmul form (tiny,
    # loop-invariant, stays VMEM-resident).
    w1t = params["w1"].reshape(9 * ni, bottle).T.astype(jnp.bfloat16)   # (bottle, 9*ni)
    w2t = params["w2"].reshape(9 * bottle, no).T.astype(jnp.bfloat16)   # (no, 9*bottle)
    b1 = params["b1"].reshape(bottle, 1).astype(jnp.float32)
    b2 = params["b2"].reshape(no, 1).astype(jnp.float32)

    cparams = pltpu.CompilerParams(
        dimension_semantics=("parallel",),
        vmem_limit_bytes=32 * 1024 * 1024)

    # ---------------- pass 1: convs + partial BN stats ----------------
    y, stats = pl.pallas_call(
        _make_pass1_kernel(H, W, ni, bottle, no),
        out_shape=(jax.ShapeDtypeStruct((N, no, HW), jnp.float32),
                   jax.ShapeDtypeStruct((N, no, 2), jnp.float32)),
        grid_spec=pltpu.PrefetchScalarGridSpec(
            num_scalar_prefetch=0,
            grid=(N,),
            in_specs=[
                pl.BlockSpec((1, ni, HW), lambda n: (n, 0, 0)),
                pl.BlockSpec((2, HWP), lambda n: (0, 0)),
                pl.BlockSpec((bottle, 9 * ni), lambda n: (0, 0)),
                pl.BlockSpec((bottle, 1), lambda n: (0, 0)),
                pl.BlockSpec((no, 9 * bottle), lambda n: (0, 0)),
                pl.BlockSpec((no, 1), lambda n: (0, 0)),
            ],
            out_specs=[
                pl.BlockSpec((1, no, HW), lambda n: (n, 0, 0)),
                pl.BlockSpec((1, no, 2), lambda n: (n, 0, 0)),
            ]),
        compiler_params=cparams,
    )(x_flat, cmask, w1t, b1, w2t, b2)

    # ---- BN finalize ONCE (tiny (no,)-sized op between the two passes) ----
    # One-pass var = E[y^2] - mean^2 (clamped); fine at these magnitudes.
    cnt = float(N * HW)
    mean = jnp.sum(stats[:, :, 0], axis=0) / cnt                  # (no,)
    var = jnp.maximum(jnp.sum(stats[:, :, 1], axis=0) / cnt - mean * mean, 0.0)
    scale = params["gamma"].astype(jnp.float32) * lax.rsqrt(var + eps)
    shift = params["beta"].astype(jnp.float32) - mean * scale
    scale = scale.reshape(no, 1)
    shift = shift.reshape(no, 1)

    # ---------------- pass 2: BN affine + residual + CELU ----------------
    inputs = [scale, shift, y, x_flat]
    in_specs = [
        pl.BlockSpec((no, 1), lambda n: (0, 0)),
        pl.BlockSpec((no, 1), lambda n: (0, 0)),
        pl.BlockSpec((1, no, HW), lambda n: (n, 0, 0)),
        pl.BlockSpec((1, ni, HW), lambda n: (n, 0, 0)),
    ]
    if use_proj:
        inputs += [params["wm"].reshape(ni, no).T.astype(jnp.bfloat16),   # (no, ni)
                   params["bm"].reshape(no, 1).astype(jnp.float32)]
        in_specs += [pl.BlockSpec((no, ni), lambda n: (0, 0)),
                     pl.BlockSpec((no, 1), lambda n: (0, 0))]

    out = pl.pallas_call(
        _make_pass2_kernel(ni, no, use_proj),
        out_shape=jax.ShapeDtypeStruct((N, no, HW), jnp.float32),
        grid_spec=pltpu.PrefetchScalarGridSpec(
            num_scalar_prefetch=0,
            grid=(N,),
            in_specs=in_specs,
            out_specs=pl.BlockSpec((1, no, HW), lambda n: (n, 0, 0))),
        compiler_params=cparams,
    )(*inputs)

    return out.reshape(N, no, H, W)       # already NCHW (free reshape)


# -----------------------------------------------------------------------------
# Pure-JAX reference (NCHW).  Matmul/conv inputs quantized to bf16 at the same
# points as the kernel (accumulation in f32), so the comparison is
# apples-to-apples with the bf16-MXU kernel.
# -----------------------------------------------------------------------------
def resblock_ref(x, p, eps=1e-5):
    def conv(inp, w, b, padding):
        y = lax.conv_general_dilated(
            inp.astype(jnp.bfloat16), w.astype(jnp.bfloat16), (1, 1), padding,
            dimension_numbers=("NCHW", "HWIO", "NCHW"),
            preferred_element_type=jnp.float32)
        return y + b.reshape(1, -1, 1, 1)

    h = jax.nn.relu(conv(x, p["w1"], p["b1"], "SAME"))
    y = conv(h, p["w2"], p["b2"], "SAME")
    mean = y.mean(axis=(0, 2, 3), keepdims=True)
    var = ((y - mean) ** 2).mean(axis=(0, 2, 3), keepdims=True)    # biased
    y = (y - mean) * lax.rsqrt(var + eps) * p["gamma"].reshape(1, -1, 1, 1) \
        + p["beta"].reshape(1, -1, 1, 1)
    ni, no = x.shape[1], y.shape[1]
    if no > ni:
        xr = jnp.pad(x, ((0, 0), (0, no - ni), (0, 0), (0, 0)))
    elif no < ni:
        xr = conv(x, p["wm"].reshape(1, 1, ni, no), p["bm"], "VALID")
    else:
        xr = x
    z = xr + y
    return jnp.where(z > 0, z, jnp.exp(jnp.minimum(z, 0.0)) - 1.0)  # CELU(1)


if __name__ == "__main__":
    key = jax.random.PRNGKey(0)
    N, ni, H, W = 2, 4, 16, 16
    no = ni                           # ResBlock default: no = ni (identity residual)
    bottle = (ni + no) // 4           # == 2

    ks = jax.random.split(key, 8)
    # NOTE: module's bn_init_zero would set gamma=0; nonzero gamma exercises the
    # whole conv->BN path numerically.
    params = {
        "w1": jax.random.normal(ks[0], (3, 3, ni, bottle), jnp.float32) * 0.2,
        "b1": jax.random.normal(ks[1], (bottle,), jnp.float32) * 0.1,
        "w2": jax.random.normal(ks[2], (3, 3, bottle, no), jnp.float32) * 0.2,
        "b2": jax.random.normal(ks[3], (no,), jnp.float32) * 0.1,
        "gamma": 1.0 + 0.5 * jax.random.normal(ks[4], (no,), jnp.float32),
        "beta": jax.random.normal(ks[5], (no,), jnp.float32) * 0.1,
    }
    x = jax.random.normal(ks[6], (N, ni, H, W), jnp.float32)

    out = jax.block_until_ready(jax.jit(resblock_pallas)(x, params))
    ref = resblock_ref(x, params)

    assert out.shape == ref.shape, (out.shape, ref.shape)
    err = float(jnp.max(jnp.abs(out - ref)))
    if not jnp.allclose(out, ref, atol=2e-3, rtol=2e-3):
        raise SystemExit(f"MISMATCH: max abs err = {err}")
    print("KERNEL_OK")
</pallas_src>

<mosaic_0001>
module attributes {stable_mosaic.version = 11 : i64} {
  func.func @kernel(%arg0: i32, %arg1: memref<1x4x256xf32, #tpu.memory_space<vmem>>, %arg2: memref<2x290xbf16, #tpu.memory_space<vmem>>, %arg3: memref<2x36xbf16, #tpu.memory_space<vmem>>, %arg4: memref<2x1xf32, #tpu.memory_space<vmem>>, %arg5: memref<4x18xbf16, #tpu.memory_space<vmem>>, %arg6: memref<4x1xf32, #tpu.memory_space<vmem>>, %arg7: memref<1x4x256xf32, #tpu.memory_space<vmem>>, %arg8: memref<1x4x2xf32, #tpu.memory_space<vmem>>) attributes {dimension_semantics = [#tpu.dimension_semantics<parallel>], iteration_bounds = array<i64: 2>, scalar_prefetch = 0 : i64, scratch_operands = 0 : i64, tpu.core_type = #tpu.core_type<tc>, window_params = [{transform_indices = @transform_0, window_bounds = array<i64: 1, 4, 256>}, {pipeline_mode = #tpu.pipeline_mode<synchronous>, transform_indices = @transform_1, window_bounds = array<i64: 2, 290>}, {pipeline_mode = #tpu.pipeline_mode<synchronous>, transform_indices = @transform_2, window_bounds = array<i64: 2, 36>}, {pipeline_mode = #tpu.pipeline_mode<synchronous>, transform_indices = @transform_3, window_bounds = array<i64: 2, 1>}, {pipeline_mode = #tpu.pipeline_mode<synchronous>, transform_indices = @transform_4, window_bounds = array<i64: 4, 18>}, {pipeline_mode = #tpu.pipeline_mode<synchronous>, transform_indices = @transform_5, window_bounds = array<i64: 4, 1>}, {transform_indices = @transform_6, window_bounds = array<i64: 1, 4, 256>}, {transform_indices = @transform_7, window_bounds = array<i64: 1, 4, 2>}]} {
    %c0 = arith.constant 0 : index
    %c0_0 = arith.constant 0 : index
    %c0_1 = arith.constant 0 : index
    %0 = vector.load %arg1[%c0, %c0_0, %c0_1] : memref<1x4x256xf32, #tpu.memory_space<vmem>>, vector<1x4x256xf32>
    %1 = vector.shape_cast %0 : vector<1x4x256xf32> to vector<4x256xf32>
    %2 = arith.truncf %1 : vector<4x256xf32> to vector<4x256xbf16>
    %cst = arith.constant 0.000000e+00 : bf16
    %3 = vector.broadcast %cst : bf16 to vector<4x17xbf16>
    %4 = tpu.concatenate %3, %2, %3 in 1 : vector<4x17xbf16>, vector<4x256xbf16>, vector<4x17xbf16> -> vector<4x290xbf16>
    %c0_2 = arith.constant 0 : index
    %c0_3 = arith.constant 0 : index
    %5 = vector.load %arg2[%c0_2, %c0_3] : memref<2x290xbf16, #tpu.memory_space<vmem>>, vector<1x290xbf16>
    %6 = vector.broadcast %5 : vector<1x290xbf16> to vector<4x290xbf16>
    %7 = arith.mulf %4, %6 : vector<4x290xbf16>
    %c1 = arith.constant 1 : index
    %c0_4 = arith.constant 0 : index
    %8 = vector.load %arg2[%c1, %c0_4] : memref<2x290xbf16, #tpu.memory_space<vmem>>, vector<1x290xbf16>
    %9 = vector.broadcast %8 : vector<1x290xbf16> to vector<4x290xbf16>
    %10 = arith.mulf %4, %9 : vector<4x290xbf16>
    %11 = vector.extract_strided_slice %7 {offsets = [0, 0], sizes = [4, 256], strides = [1, 1]} : vector<4x290xbf16> to vector<4x256xbf16>
    %12 = vector.extract_strided_slice %4 {offsets = [0, 1], sizes = [4, 256], strides = [1, 1]} : vector<4x290xbf16> to vector<4x256xbf16>
    %13 = vector.extract_strided_slice %10 {offsets = [0, 2], sizes = [4, 256], strides = [1, 1]} : vector<4x290xbf16> to vector<4x256xbf16>
    %14 = vector.extract_strided_slice %7 {offsets = [0, 16], sizes = [4, 256], strides = [1, 1]} : vector<4x290xbf16> to vector<4x256xbf16>
    %15 = vector.extract_strided_slice %4 {offsets = [0, 17], sizes = [4, 256], strides = [1, 1]} : vector<4x290xbf16> to vector<4x256xbf16>
    %16 = vector.extract_strided_slice %10 {offsets = [0, 18], sizes = [4, 256], strides = [1, 1]} : vector<4x290xbf16> to vector<4x256xbf16>
    %17 = vector.extract_strided_slice %7 {offsets = [0, 32], sizes = [4, 256], strides = [1, 1]} : vector<4x290xbf16> to vector<4x256xbf16>
    %18 = vector.extract_strided_slice %4 {offsets = [0, 33], sizes = [4, 256], strides = [1, 1]} : vector<4x290xbf16> to vector<4x256xbf16>
    %19 = vector.extract_strided_slice %10 {offsets = [0, 34], sizes = [4, 256], strides = [1, 1]} : vector<4x290xbf16> to vector<4x256xbf16>
    %20 = tpu.concatenate %11, %12, %13, %14, %15, %16, %17, %18, %19 in 0 : vector<4x256xbf16>, vector<4x256xbf16>, vector<4x256xbf16>, vector<4x256xbf16>, vector<4x256xbf16>, vector<4x256xbf16>, vector<4x256xbf16>, vector<4x256xbf16>, vector<4x256xbf16> -> vector<36x256xbf16>
    %c0_5 = arith.constant 0 : index
    %c0_6 = arith.constant 0 : index
    %21 = vector.load %arg3[%c0_5, %c0_6] : memref<2x36xbf16, #tpu.memory_space<vmem>>, vector<2x36xbf16>
    %cst_7 = arith.constant dense<0.000000e+00> : vector<2x256xf32>
    %22 = tpu.matmul %21, %20, %cst_7 {dimension_numbers = #tpu.dot_dimension_numbers<[1], [0], [0], [1], [0, 0, 1, 1], [], []>} : vector<2x36xbf16>, vector<36x256xbf16>, vector<2x256xf32> -> vector<2x256xf32>
    %c0_8 = arith.constant 0 : index
    %c0_9 = arith.constant 0 : index
    %23 = vector.load %arg4[%c0_8, %c0_9] : memref<2x1xf32, #tpu.memory_space<vmem>>, vector<2x1xf32>
    %24 = vector.broadcast %23 : vector<2x1xf32> to vector<2x256xf32>
    %25 = arith.addf %22, %24 : vector<2x256xf32>
    %cst_10 = arith.constant 0.000000e+00 : f32
    %26 = vector.broadcast %cst_10 : f32 to vector<2x256xf32>
    %27 = arith.maximumf %25, %26 : vector<2x256xf32>
    %28 = arith.truncf %27 : vector<2x256xf32> to vector<2x256xbf16>
    %cst_11 = arith.constant 0.000000e+00 : bf16
    %29 = vector.broadcast %cst_11 : bf16 to vector<2x17xbf16>
    %30 = tpu.concatenate %29, %28, %29 in 1 : vector<2x17xbf16>, vector<2x256xbf16>, vector<2x17xbf16> -> vector<2x290xbf16>
    %c0_12 = arith.constant 0 : index
    %c0_13 = arith.constant 0 : index
    %31 = vector.load %arg2[%c0_12, %c0_13] : memref<2x290xbf16, #tpu.memory_space<vmem>>, vector<1x290xbf16>
    %32 = vector.broadcast %31 : vector<1x290xbf16> to vector<2x290xbf16>
    %33 = arith.mulf %30, %32 : vector<2x290xbf16>
    %c1_14 = arith.constant 1 : index
    %c0_15 = arith.constant 0 : index
    %34 = vector.load %arg2[%c1_14, %c0_15] : memref<2x290xbf16, #tpu.memory_space<vmem>>, vector<1x290xbf16>
    %35 = vector.broadcast %34 : vector<1x290xbf16> to vector<2x290xbf16>
    %36 = arith.mulf %30, %35 : vector<2x290xbf16>
    %37 = vector.extract_strided_slice %33 {offsets = [0, 0], sizes = [2, 256], strides = [1, 1]} : vector<2x290xbf16> to vector<2x256xbf16>
    %38 = vector.extract_strided_slice %30 {offsets = [0, 1], sizes = [2, 256], strides = [1, 1]} : vector<2x290xbf16> to vector<2x256xbf16>
    %39 = vector.extract_strided_slice %36 {offsets = [0, 2], sizes = [2, 256], strides = [1, 1]} : vector<2x290xbf16> to vector<2x256xbf16>
    %40 = vector.extract_strided_slice %33 {offsets = [0, 16], sizes = [2, 256], strides = [1, 1]} : vector<2x290xbf16> to vector<2x256xbf16>
    %41 = vector.extract_strided_slice %30 {offsets = [0, 17], sizes = [2, 256], strides = [1, 1]} : vector<2x290xbf16> to vector<2x256xbf16>
    %42 = vector.extract_strided_slice %36 {offsets = [0, 18], sizes = [2, 256], strides = [1, 1]} : vector<2x290xbf16> to vector<2x256xbf16>
    %43 = vector.extract_strided_slice %33 {offsets = [0, 32], sizes = [2, 256], strides = [1, 1]} : vector<2x290xbf16> to vector<2x256xbf16>
    %44 = vector.extract_strided_slice %30 {offsets = [0, 33], sizes = [2, 256], strides = [1, 1]} : vector<2x290xbf16> to vector<2x256xbf16>
    %45 = vector.extract_strided_slice %36 {offsets = [0, 34], sizes = [2, 256], strides = [1, 1]} : vector<2x290xbf16> to vector<2x256xbf16>
    %46 = tpu.concatenate %37, %38, %39, %40, %41, %42, %43, %44, %45 in 0 : vector<2x256xbf16>, vector<2x256xbf16>, vector<2x256xbf16>, vector<2x256xbf16>, vector<2x256xbf16>, vector<2x256xbf16>, vector<2x256xbf16>, vector<2x256xbf16>, vector<2x256xbf16> -> vector<18x256xbf16>
    %c0_16 = arith.constant 0 : index
    %c0_17 = arith.constant 0 : index
    %47 = vector.load %arg5[%c0_16, %c0_17] : memref<4x18xbf16, #tpu.memory_space<vmem>>, vector<4x18xbf16>
    %cst_18 = arith.constant dense<0.000000e+00> : vector<4x256xf32>
    %48 = tpu.matmul %47, %46, %cst_18 {dimension_numbers = #tpu.dot_dimension_numbers<[1], [0], [0], [1], [0, 0, 1, 1], [], []>} : vector<4x18xbf16>, vector<18x256xbf16>, vector<4x256xf32> -> vector<4x256xf32>
    %c0_19 = arith.constant 0 : index
    %c0_20 = arith.constant 0 : index
    %49 = vector.load %arg6[%c0_19, %c0_20] : memref<4x1xf32, #tpu.memory_space<vmem>>, vector<4x1xf32>
    %50 = vector.broadcast %49 : vector<4x1xf32> to vector<4x256xf32>
    %51 = arith.addf %48, %50 : vector<4x256xf32>
    %c0_21 = arith.constant 0 : index
    %c0_22 = arith.constant 0 : index
    %c0_23 = arith.constant 0 : index
    %52 = vector.load %arg7[%c0_21, %c0_22, %c0_23] : memref<1x4x256xf32, #tpu.memory_space<vmem>>, vector<1x4x256xf32>
    %53 = vector.shape_cast %52 : vector<1x4x256xf32> to vector<4x256xf32>
    %54 = vector.shape_cast %51 : vector<4x256xf32> to vector<1x4x256xf32>
    tpu.vector_store %arg7[%c0_21, %c0_22, %c0_23], %54 {strides = array<i32>} : memref<1x4x256xf32, #tpu.memory_space<vmem>>, vector<1x4x256xf32>,
    %cst_24 = arith.constant dense<0.000000e+00> : vector<4xf32>
    %55 = vector.multi_reduction <add>, %51, %cst_24 [1] : vector<4x256xf32> to vector<4xf32>
    %56 = vector.shape_cast %55 : vector<4xf32> to vector<4x1xf32>
    %57 = arith.mulf %51, %51 : vector<4x256xf32>
    %cst_25 = arith.constant dense<0.000000e+00> : vector<4xf32>
    %58 = vector.multi_reduction <add>, %57, %cst_25 [1] : vector<4x256xf32> to vector<4xf32>
    %59 = vector.shape_cast %58 : vector<4xf32> to vector<4x1xf32>
    %60 = tpu.concatenate %56, %59 in 1 : vector<4x1xf32>, vector<4x1xf32> -> vector<4x2xf32>
    %c0_26 = arith.constant 0 : index
    %c0_27 = arith.constant 0 : index
    %c0_28 = arith.constant 0 : index
    %61 = vector.load %arg8[%c0_26, %c0_27, %c0_28] : memref<1x4x2xf32, #tpu.memory_space<vmem>>, vector<1x4x2xf32>
    %62 = vector.shape_cast %61 : vector<1x4x2xf32> to vector<4x2xf32>
    %63 = vector.shape_cast %60 : vector<4x2xf32> to vector<1x4x2xf32>
    tpu.vector_store %arg8[%c0_26, %c0_27, %c0_28], %63 {strides = array<i32>} : memref<1x4x2xf32, #tpu.memory_space<vmem>>, vector<1x4x2xf32>,
    return
  }
  func.func @transform_0(%arg0: i32) -> (i32, i32, i32) {
    %c0_i32 = arith.constant 0 : i32
    %c0_i32_0 = arith.constant 0 : i32
    %c0_i32_1 = arith.constant 0 : i32
    return %arg0, %c0_i32, %c0_i32_0 : i32, i32, i32
  }
  func.func @transform_1(%arg0: i32) -> (i32, i32) {
    %c0_i32 = arith.constant 0 : i32
    %c0_i32_0 = arith.constant 0 : i32
    %c0_i32_1 = arith.constant 0 : i32
    return %c0_i32, %c0_i32_0 : i32, i32
  }
  func.func @transform_2(%arg0: i32) -> (i32, i32) {
    %c0_i32 = arith.constant 0 : i32
    %c0_i32_0 = arith.constant 0 : i32
    %c0_i32_1 = arith.constant 0 : i32
    return %c0_i32, %c0_i32_0 : i32, i32
  }
  func.func @transform_3(%arg0: i32) -> (i32, i32) {
    %c0_i32 = arith.constant 0 : i32
    %c0_i32_0 = arith.constant 0 : i32
    %c0_i32_1 = arith.constant 0 : i32
    return %c0_i32, %c0_i32_0 : i32, i32
  }
  func.func @transform_4(%arg0: i32) -> (i32, i32) {
    %c0_i32 = arith.constant 0 : i32
    %c0_i32_0 = arith.constant 0 : i32
    %c0_i32_1 = arith.constant 0 : i32
    return %c0_i32, %c0_i32_0 : i32, i32
  }
  func.func @transform_5(%arg0: i32) -> (i32, i32) {
    %c0_i32 = arith.constant 0 : i32
    %c0_i32_0 = arith.constant 0 : i32
    %c0_i32_1 = arith.constant 0 : i32
    return %c0_i32, %c0_i32_0 : i32, i32
  }
  func.func @transform_6(%arg0: i32) -> (i32, i32, i32) {
    %c0_i32 = arith.constant 0 : i32
    %c0_i32_0 = arith.constant 0 : i32
    %c0_i32_1 = arith.constant 0 : i32
    return %arg0, %c0_i32, %c0_i32_0 : i32, i32, i32
  }
  func.func @transform_7(%arg0: i32) -> (i32, i32, i32) {
    %c0_i32 = arith.constant 0 : i32
    %c0_i32_0 = arith.constant 0 : i32
    %c0_i32_1 = arith.constant 0 : i32
    return %arg0, %c0_i32, %c0_i32_0 : i32, i32, i32
  }
}

module attributes {stable_mosaic.version = 11 : i64} {
  func.func @kernel(%arg0: i32, %arg1: memref<4x1xf32, #tpu.memory_space<vmem>>, %arg2: memref<4x1xf32, #tpu.memory_space<vmem>>, %arg3: memref<1x4x256xf32, #tpu.memory_space<vmem>>, %arg4: memref<1x4x256xf32, #tpu.memory_space<vmem>>, %arg5: memref<1x4x256xf32, #tpu.memory_space<vmem>>) attributes {dimension_semantics = [#tpu.dimension_semantics<parallel>], iteration_bounds = array<i64: 2>, scalar_prefetch = 0 : i64, scratch_operands = 0 : i64, tpu.core_type = #tpu.core_type<tc>, window_params = [{pipeline_mode = #tpu.pipeline_mode<synchronous>, transform_indices = @transform_0, window_bounds = array<i64: 4, 1>}, {pipeline_mode = #tpu.pipeline_mode<synchronous>, transform_indices = @transform_1, window_bounds = array<i64: 4, 1>}, {transform_indices = @transform_2, window_bounds = array<i64: 1, 4, 256>}, {transform_indices = @transform_3, window_bounds = array<i64: 1, 4, 256>}, {transform_indices = @transform_4, window_bounds = array<i64: 1, 4, 256>}]} {
    %c0 = arith.constant 0 : index
    %c0_0 = arith.constant 0 : index
    %c0_1 = arith.constant 0 : index
    %0 = vector.load %arg3[%c0, %c0_0, %c0_1] : memref<1x4x256xf32, #tpu.memory_space<vmem>>, vector<1x4x256xf32>
    %1 = vector.shape_cast %0 : vector<1x4x256xf32> to vector<4x256xf32>
    %c0_2 = arith.constant 0 : index
    %c0_3 = arith.constant 0 : index
    %2 = vector.load %arg1[%c0_2, %c0_3] : memref<4x1xf32, #tpu.memory_space<vmem>>, vector<4x1xf32>
    %3 = vector.broadcast %2 : vector<4x1xf32> to vector<4x256xf32>
    %4 = arith.mulf %1, %3 : vector<4x256xf32>
    %c0_4 = arith.constant 0 : index
    %c0_5 = arith.constant 0 : index
    %5 = vector.load %arg2[%c0_4, %c0_5] : memref<4x1xf32, #tpu.memory_space<vmem>>, vector<4x1xf32>
    %6 = vector.broadcast %5 : vector<4x1xf32> to vector<4x256xf32>
    %7 = arith.addf %4, %6 : vector<4x256xf32>
    %c0_6 = arith.constant 0 : index
    %c0_7 = arith.constant 0 : index
    %c0_8 = arith.constant 0 : index
    %8 = vector.load %arg4[%c0_6, %c0_7, %c0_8] : memref<1x4x256xf32, #tpu.memory_space<vmem>>, vector<1x4x256xf32>
    %9 = vector.shape_cast %8 : vector<1x4x256xf32> to vector<4x256xf32>
    %10 = arith.addf %9, %7 : vector<4x256xf32>
    %cst = arith.constant 0.000000e+00 : f32
    %11 = vector.broadcast %cst : f32 to vector<4x256xf32>
    %12 = arith.cmpf ogt, %10, %11 : vector<4x256xf32>
    %cst_9 = arith.constant 0.000000e+00 : f32
    %13 = vector.broadcast %cst_9 : f32 to vector<4x256xf32>
    %14 = arith.minimumf %10, %13 : vector<4x256xf32>
    %15 = math.exp %14 : vector<4x256xf32>
    %cst_10 = arith.constant 1.000000e+00 : f32
    %16 = vector.broadcast %cst_10 : f32 to vector<4x256xf32>
    %17 = arith.subf %15, %16 : vector<4x256xf32>
    %18 = arith.select %12, %10, %17 : vector<4x256xi1>, vector<4x256xf32>
    %c0_11 = arith.constant 0 : index
    %c0_12 = arith.constant 0 : index
    %c0_13 = arith.constant 0 : index
    %19 = vector.load %arg5[%c0_11, %c0_12, %c0_13] : memref<1x4x256xf32, #tpu.memory_space<vmem>>, vector<1x4x256xf32>
    %20 = vector.shape_cast %19 : vector<1x4x256xf32> to vector<4x256xf32>
    %21 = vector.shape_cast %18 : vector<4x256xf32> to vector<1x4x256xf32>
    tpu.vector_store %arg5[%c0_11, %c0_12, %c0_13], %21 {strides = array<i32>} : memref<1x4x256xf32, #tpu.memory_space<vmem>>, vector<1x4x256xf32>,
    return
  }
  func.func @transform_0(%arg0: i32) -> (i32, i32) {
    %c0_i32 = arith.constant 0 : i32
    %c0_i32_0 = arith.constant 0 : i32
    %c0_i32_1 = arith.constant 0 : i32
    return %c0_i32, %c0_i32_0 : i32, i32
  }
  func.func @transform_1(%arg0: i32) -> (i32, i32) {
    %c0_i32 = arith.constant 0 : i32
    %c0_i32_0 = arith.constant 0 : i32
    %c0_i32_1 = arith.constant 0 : i32
    return %c0_i32, %c0_i32_0 : i32, i32
  }
  func.func @transform_2(%arg0: i32) -> (i32, i32, i32) {
    %c0_i32 = arith.constant 0 : i32
    %c0_i32_0 = arith.constant 0 : i32
    %c0_i32_1 = arith.constant 0 : i32
    return %arg0, %c0_i32, %c0_i32_0 : i32, i32, i32
  }
  func.func @transform_3(%arg0: i32) -> (i32, i32, i32) {
    %c0_i32 = arith.constant 0 : i32
    %c0_i32_0 = arith.constant 0 : i32
    %c0_i32_1 = arith.constant 0 : i32
    return %arg0, %c0_i32, %c0_i32_0 : i32, i32, i32
  }
  func.func @transform_4(%arg0: i32) -> (i32, i32, i32) {
    %c0_i32 = arith.constant 0 : i32
    %c0_i32_0 = arith.constant 0 : i32
    %c0_i32_1 = arith.constant 0 : i32
    return %arg0, %c0_i32, %c0_i32_0 : i32, i32, i32
  }
}

</mosaic_0001>

<llo_original>
// kernel: resblock_pallas.3
$region0: #{resblock_pallas.3}
  #allocation0 [shape = 'u32[]', space=smem, size = 0x4, offset = 0x4, fixed_abs, tag = 'smem constant byte address 0x4 - core index']
  #allocation1 [shape = 'u32[72,128]{1,0:T(1,128)}', space=vmem, size = 0x9000, scoped, tag = 'internal scratch']
  %s0 = inlined_call_operand.vmem [shape: f32[4,1], index: 0, kind: input, shape index: {}]
  %s1 = inlined_call_operand.vmem [shape: f32[4,1], index: 1, kind: input, shape index: {}]
  %s2 = inlined_call_operand.vmem [shape: f32[2,4,256], index: 2, kind: input, shape index: {}]
  %s3 = inlined_call_operand.vmem [shape: f32[2,4,256], index: 3, kind: input, shape index: {}]
  %s4 = inlined_call_operand.vmem [shape: f32[2,4,256], index: 4, kind: output, shape index: {}]
  %s5 = sld [smem:[#allocation0]]
  $region49: #{resblock_pallas.3} parent=0
    _
  %s7 = ssub.s32 1, %s5
  %s8 = scalar_select 0, %s7, %s5
  loop: start=0, step=1, limit=4
  $region2: #{resblock_pallas.3} parent=0 // loop_pre_header
    _
  $region3: #{resblock_pallas.3} parent=0 // loop_header
    %s10 = sphi 0, %s14
    %p11 = scmp.ge.s32.totalorder %s10, 4
    %s18 = sphi 0, %s18
    %s20 = sphi 0, %s18
    %s21 = sphi 0, %s20
    %s35 = sphi 0, %s21
    %s39 = sphi 0, %s39
    %s41 = sphi 0, %s39
    %s42 = sphi 0, %s41
    %s56 = sphi 0, %s42
    %s62 = sphi 0, %s64
    %s65 = sphi 0, %s62
    %s66 = sphi 0, %s65
    %s82 = sphi 0, %s66
    %s88 = sphi 0, %s90
    %s91 = sphi 0, %s88
    %s92 = sphi 0, %s91
    %s108 = sphi 0, %s92
    %s114 = sphi 0, %s116
    %s117 = sphi 0, %s114
    %s118 = sphi 0, %s117
    %s134 = sphi 0, %s118
  $region4: #{resblock_pallas.3} parent=0 // loop_header_branch
    %13 = sbr.rel (%p11) target = $region8
  $region5: #{resblock_pallas.3} parent=0 // loop_body
    %s15 = ssub.s32 %s10, 1
    %s16 = ssub.s32 %s10, 2
    %s17 = sadd.s32 %s10, 1
    %s19 = sadd.s32 %s18, 1
    %p22 = scmp.eq.s32.totalorder %s10, 1
    %p23 = scmp.ne.s32.totalorder %s18, %s20
    %p24 = scmp.eq.s32.totalorder %s10, 0
    %p25 = por %p23, %p24
    %p26 = scmp.ne.s32.totalorder %s18, %s20
    %p27 = scmp.eq.s32.totalorder %s15, 1
    %p28 = por %p26, %p27
    %p29 = scmp.ne.s32.totalorder %s20, %s21
    %p30 = scmp.eq.s32.totalorder %s15, 0
    %p31 = por %p29, %p30
    %p32 = scmp.ne.s32.totalorder %s20, %s21
    %p33 = scmp.eq.s32.totalorder %s16, 1
    %p34 = por %p32, %p33
    %p36 = scmp.ne.s32.totalorder %s21, %s35
    %p37 = scmp.eq.s32.totalorder %s16, 0
    %p38 = por %p36, %p37
    %s40 = sadd.s32 %s39, 1
    %p43 = scmp.eq.s32.totalorder %s10, 1
    %p44 = scmp.ne.s32.totalorder %s39, %s41
    %p45 = scmp.eq.s32.totalorder %s10, 0
    %p46 = por %p44, %p45
    %p47 = scmp.ne.s32.totalorder %s39, %s41
    %p48 = scmp.eq.s32.totalorder %s15, 1
    %p49 = por %p47, %p48
    %p50 = scmp.ne.s32.totalorder %s41, %s42
    %p51 = scmp.eq.s32.totalorder %s15, 0
    %p52 = por %p50, %p51
    %p53 = scmp.ne.s32.totalorder %s41, %s42
    %p54 = scmp.eq.s32.totalorder %s16, 1
    %p55 = por %p53, %p54
    %p57 = scmp.ne.s32.totalorder %s42, %s56
    %p58 = scmp.eq.s32.totalorder %s16, 0
    %p59 = por %p57, %p58
    %s60 = ssub.s32 %s10, %s17
    %p61 = scmp.eq.s32.totalorder %s60, 0
    %s63 = sadd.s32 %s62, 1
    %s64 = scalar_select %p61, %s62, %s63
    %p67 = pneg %p61
    %p68 = scmp.eq.s32.totalorder %s10, 1
    %p69 = por %p67, %p68
    %p70 = scmp.ne.s32.totalorder %s62, %s65
    %p71 = scmp.eq.s32.totalorder %s10, 0
    %p72 = por %p70, %p71
    %p73 = scmp.ne.s32.totalorder %s62, %s65
    %p74 = scmp.eq.s32.totalorder %s15, 1
    %p75 = por %p73, %p74
    %p76 = scmp.ne.s32.totalorder %s65, %s66
    %p77 = scmp.eq.s32.totalorder %s15, 0
    %p78 = por %p76, %p77
    %p79 = scmp.ne.s32.totalorder %s65, %s66
    %p80 = scmp.eq.s32.totalorder %s16, 1
    %p81 = por %p79, %p80
    %p83 = scmp.ne.s32.totalorder %s66, %s82
    %p84 = scmp.eq.s32.totalorder %s16, 0
    %p85 = por %p83, %p84
    %s86 = ssub.s32 %s10, %s17
    %p87 = scmp.eq.s32.totalorder %s86, 0
    %s89 = sadd.s32 %s88, 1
    %s90 = scalar_select %p87, %s88, %s89
    %p93 = pneg %p87
    %p94 = scmp.eq.s32.totalorder %s10, 1
    %p95 = por %p93, %p94
    %p96 = scmp.ne.s32.totalorder %s88, %s91
    %p97 = scmp.eq.s32.totalorder %s10, 0
    %p98 = por %p96, %p97
    %p99 = scmp.ne.s32.totalorder %s88, %s91
    %p100 = scmp.eq.s32.totalorder %s15, 1
    %p101 = por %p99, %p100
    %p102 = scmp.ne.s32.totalorder %s91, %s92
    %p103 = scmp.eq.s32.totalorder %s15, 0
    %p104 = por %p102, %p103
    %p105 = scmp.ne.s32.totalorder %s91, %s92
    %p106 = scmp.eq.s32.totalorder %s16, 1
    %p107 = por %p105, %p106
    %p109 = scmp.ne.s32.totalorder %s92, %s108
    %p110 = scmp.eq.s32.totalorder %s16, 0
    %p111 = por %p109, %p110
    %s112 = ssub.s32 %s10, %s17
    %p113 = scmp.eq.s32.totalorder %s112, 0
    %s115 = sadd.s32 %s114, 1
    %s116 = scalar_select %p113, %s114, %s115
    %p119 = pneg %p113
    %p120 = scmp.eq.s32.totalorder %s10, 1
    %p121 = por %p119, %p120
    %p122 = scmp.ne.s32.totalorder %s114, %s117
    %p123 = scmp.eq.s32.totalorder %s10, 0
    %p124 = por %p122, %p123
    %p125 = scmp.ne.s32.totalorder %s114, %s117
    %p126 = scmp.eq.s32.totalorder %s15, 1
    %p127 = por %p125, %p126
    %p128 = scmp.ne.s32.totalorder %s117, %s118
    %p129 = scmp.eq.s32.totalorder %s15, 0
    %p130 = por %p128, %p129
    %p131 = scmp.ne.s32.totalorder %s117, %s118
    %p132 = scmp.eq.s32.totalorder %s16, 1
    %p133 = por %p131, %p132
    %p135 = scmp.ne.s32.totalorder %s118, %s134
    %p136 = scmp.eq.s32.totalorder %s16, 0
    %p137 = por %p135, %p136
    %p138 = scmp.le.s32.totalorder 1, %s10
    %p139 = scmp.lt.s32.totalorder %s10, 3
    %p140 = pnand %p138, %p139
    %p141 = pneg %p140
    // Predicated region
    $region9: #{resblock_pallas.3} parent=5 // pred_check
      _
    $region10: #{resblock_pallas.3} parent=5 // pred_check_branch
      %143 = sbr.rel (%p140) target = $region12
    $region11: #{resblock_pallas.3} parent=5 // pred_region
      %s144 = ssub.s32 %s10, 1
      // Predicated region
      $region13: #{resblock_pallas.3} parent=11 // pred_check
        %p145 = pneg %p31
      $region14: #{resblock_pallas.3} parent=11 // pred_check_branch
        %147 = sbr.rel (%p145) target = $region16
      $region15: #{resblock_pallas.3} parent=11 // pred_region
        _
      $region16: #{resblock_pallas.3} parent=11 // pred_fallthru
        _
      // Predicated region
      $region17: #{resblock_pallas.3} parent=11 // pred_check
        %p148 = pneg %p52
      $region18: #{resblock_pallas.3} parent=11 // pred_check_branch
        %150 = sbr.rel (%p148) target = $region20
      $region19: #{resblock_pallas.3} parent=11 // pred_region
        _
      $region20: #{resblock_pallas.3} parent=11 // pred_fallthru
        _
    $region12: #{resblock_pallas.3} parent=5 // pred_fallthru
      _
    %p151 = scmp.lt.s32.totalorder %s10, 2
    // Predicated region
    $region21: #{resblock_pallas.3} parent=5 // pred_check
      %p152 = pneg %p151
    $region22: #{resblock_pallas.3} parent=5 // pred_check_branch
      %154 = sbr.rel (%p152) target = $region24
    $region23: #{resblock_pallas.3} parent=5 // pred_region
      // Predicated region
      $region25: #{resblock_pallas.3} parent=23 // pred_check
        %p155 = pneg %p72
      $region26: #{resblock_pallas.3} parent=23 // pred_check_branch
        %157 = sbr.rel (%p155) target = $region28
      $region27: #{resblock_pallas.3} parent=23 // pred_region
        %p158 = scmp.lt.s32.totalorder %s10, 1
        %s159 = scalar_select %p158, %s10, 1
        %s160 = smul.addr %s159, 2
        %s161 = smul.addr %s160, 4
        %s162 = scalar_lea.vmem %s2, %s161
      $region28: #{resblock_pallas.3} parent=23 // pred_fallthru
        _
      // Predicated region
      $region29: #{resblock_pallas.3} parent=23 // pred_check
        %p163 = pneg %p98
      $region30: #{resblock_pallas.3} parent=23 // pred_check_branch
        %165 = sbr.rel (%p163) target = $region32
      $region31: #{resblock_pallas.3} parent=23 // pred_region
        %p166 = scmp.lt.s32.totalorder %s10, 1
        %s167 = scalar_select %p166, %s10, 1
        %s168 = smul.addr %s167, 2
        %s169 = smul.addr %s168, 4
        %s170 = scalar_lea.vmem %s3, %s169
      $region32: #{resblock_pallas.3} parent=23 // pred_fallthru
        _
    $region24: #{resblock_pallas.3} parent=5 // pred_fallthru
      _
    %p171 = scmp.le.s32.totalorder 1, %s10
    %p172 = scmp.lt.s32.totalorder %s10, 3
    %p173 = pnand %p171, %p172
    %p174 = pneg %p173
    // Predicated region
    $region33: #{resblock_pallas.3} parent=5 // pred_check
      _
    $region34: #{resblock_pallas.3} parent=5 // pred_check_branch
      %176 = sbr.rel (%p173) target = $region36
    $region35: #{resblock_pallas.3} parent=5 // pred_region
      %s177 = ssub.s32 %s10, 1
      %p178 = pneg %p31
      %p179 = pneg %p28
      %p180 = pneg %p52
      %p181 = pneg %p49
      %p182 = scmp.lt.s32.totalorder %s15, 1
      %s183 = scalar_select %p182, %s15, 1
      %s184 = smul.addr %s183, 2
      %s185 = smul.addr %s184, 4
      %s186 = scalar_lea.vmem %s2, %s185
      %p187 = pneg %p78
      %p188 = pneg %p75
      %p189 = scmp.lt.s32.totalorder %s15, 1
      %s190 = scalar_select %p189, %s15, 1
      %s191 = smul.addr %s190, 2
      %s192 = smul.addr %s191, 4
      %s193 = scalar_lea.vmem %s3, %s192
      %p194 = pneg %p104
      %p195 = pneg %p101
      %p196 = pneg %p130
      %p197 = pneg %p127
      %p198 = scmp.lt.s32.totalorder %s15, 1
      %s199 = scalar_select %p198, %s15, 1
      %s200 = smul.addr %s199, 2
      %s201 = smul.addr %s200, 4
      %s202 = scalar_lea.vmem %s4, %s201
      %p203 = scmp.lt.s32.totalorder %s15, 1
      %s204 = scalar_select %p203, %s15, 1
      %s205 = smul.addr %s204, 2
      %s206 = smul.addr %s205, 4
      %s207 = scalar_lea.vmem %s2, %s206
      %p208 = scmp.lt.s32.totalorder %s15, 1
      %s209 = scalar_select %p208, %s15, 1
      %s210 = smul.addr %s209, 2
      %s211 = smul.addr %s210, 4
      %s212 = scalar_lea.vmem %s3, %s211
      %p213 = scmp.lt.s32.totalorder %s15, 1
      %s214 = scalar_select %p213, %s15, 1
      %s215 = smul.addr %s214, 2
      %s216 = smul.addr %s215, 4
      %s217 = scalar_lea.vmem %s4, %s216
      %v218 = vld [vmem:[%s207] sm:$0xff]
      %v219 = vld [vmem:[%s0] sm:$0xf]
      %221 = vset.pattern.permute.xlu0 0
      %222 = vperm.xlu0 %221, %v219
      %v223 = vpop.permute.xlu0 %222
      %v225 = vunpack.c.l.s4 839922192
      %v226 = vunpack.c.0.s8 %v225
      %v227 = vperm.slane %v223, %v226
      %v229 = vmul.f32 %v218, %v227
      %v230 = vld [vmem:[%s1] sm:$0xf]
      %232 = vset.pattern.permute.xlu0 0
      %233 = vperm.xlu0 %232, %v230
      %v234 = vpop.permute.xlu0 %233
      %v236 = vunpack.c.l.s4 839922192
      %v237 = vunpack.c.0.s8 %v236
      %v238 = vperm.slane %v234, %v237
      %v240 = vadd.f32 %v229, %v238
      %v241 = vld [vmem:[%s212] sm:$0xff]
      %v242 = vadd.f32 %v241, %v240
      %vm243 = vcmp.gt.f32.partialorder %v242, 0.0
      %v244 = vmin.f32 %v242, 0.0
      %v245 = vmul.f32 %v244, 1.442695
      %v246 = vpow.pop %v245
      %v247 = vsub.f32 %v246, 1.0
      %v248 = vsel %vm243, %v242, %v247
      %249 = vst [vmem:[%s217] sm:$0xff] %v248
      %p250 = scmp.lt.s32.totalorder %s15, 1
      %s251 = scalar_select %p250, %s15, 1
      %s252 = smul.addr %s251, 2
      %s253 = smul.addr %s252, 4
      %s254 = scalar_lea.vmem %s4, %s253
      // Predicated region
      $region37: #{resblock_pallas.3} parent=35 // pred_check
        %p255 = pneg %p127
      $region38: #{resblock_pallas.3} parent=35 // pred_check_branch
        %257 = sbr.rel (%p255) target = $region40
      $region39: #{resblock_pallas.3} parent=35 // pred_region
        _
      $region40: #{resblock_pallas.3} parent=35 // pred_fallthru
        _
    $region36: #{resblock_pallas.3} parent=5 // pred_fallthru
      _
    %p258 = scmp.le.s32.totalorder 2, %s10
    // Predicated region
    $region41: #{resblock_pallas.3} parent=5 // pred_check
      %p259 = pneg %p258
    $region42: #{resblock_pallas.3} parent=5 // pred_check_branch
      %261 = sbr.rel (%p259) target = $region44
    $region43: #{resblock_pallas.3} parent=5 // pred_region
      %s262 = ssub.s32 %s10, 2
      // Predicated region
      $region45: #{resblock_pallas.3} parent=43 // pred_check
        %p263 = pneg %p133
      $region46: #{resblock_pallas.3} parent=43 // pred_check_branch
        %265 = sbr.rel (%p263) target = $region48
      $region47: #{resblock_pallas.3} parent=43 // pred_region
        %p266 = scmp.lt.s32.totalorder %s16, 1
        %s267 = scalar_select %p266, %s16, 1
        %s268 = smul.addr %s267, 2
        %s269 = smul.addr %s268, 4
        %s270 = scalar_lea.vmem %s4, %s269
      $region48: #{resblock_pallas.3} parent=43 // pred_fallthru
        _
    $region44: #{resblock_pallas.3} parent=5 // pred_fallthru
      _
  $region6: #{resblock_pallas.3} parent=0 // loop_footer
    %s14 = sadd.s32 1, %s10
  $region7: #{resblock_pallas.3} parent=0 // loop_footer_branch
    %9 = sbr.rel target = $region3
  $region8: #{resblock_pallas.3} parent=0 // loop_exit
    _

// kernel: resblock_pallas.2
$region0: #{resblock_pallas.2}
  #allocation0 [shape = 'u32[]', space=smem, size = 0x4, offset = 0x4, fixed_abs, tag = 'smem constant byte address 0x4 - core index']
  #allocation1 [shape = 'u32[72,128]{1,0:T(1,128)}', space=vmem, size = 0x9000, scoped, tag = 'internal scratch']
  %s0 = inlined_call_operand.vmem [shape: f32[2,4,256], index: 0, kind: input, shape index: {}]
  %s1 = inlined_call_operand.vmem [shape: bf16[2,290], index: 1, kind: input, shape index: {}]
  %s2 = inlined_call_operand.vmem [shape: bf16[2,36], index: 2, kind: input, shape index: {}]
  %s3 = inlined_call_operand.vmem [shape: f32[2,1], index: 3, kind: input, shape index: {}]
  %s4 = inlined_call_operand.vmem [shape: bf16[4,18], index: 4, kind: input, shape index: {}]
  %s5 = inlined_call_operand.vmem [shape: f32[4,1], index: 5, kind: input, shape index: {}]
  %s6 = inlined_call_operand.vmem [shape: f32[2,4,256], index: 6, kind: output, shape index: {0}]
  %s7 = inlined_call_operand.vmem [shape: f32[2,4,2], index: 7, kind: output, shape index: {1}]
  %8 = xla_tuple %s6, %s7
  %s9 = sld [smem:[#allocation0]]
  $region65: #{resblock_pallas.2} parent=0
    _
  %s11 = ssub.s32 1, %s9
  %s12 = scalar_select 0, %s11, %s9
  loop: start=0, step=1, limit=4
  $region2: #{resblock_pallas.2} parent=0 // loop_pre_header
    _
  $region3: #{resblock_pallas.2} parent=0 // loop_header
    %s14 = sphi 0, %s18
    %p15 = scmp.ge.s32.totalorder %s14, 4
    %s24 = sphi 0, %s26
    %s27 = sphi 0, %s24
    %s28 = sphi 0, %s27
    %s44 = sphi 0, %s28
    %s48 = sphi 0, %s48
    %s50 = sphi 0, %s48
    %s51 = sphi 0, %s50
    %s65 = sphi 0, %s51
    %s69 = sphi 0, %s69
    %s71 = sphi 0, %s69
    %s72 = sphi 0, %s71
    %s86 = sphi 0, %s72
    %s90 = sphi 0, %s90
    %s92 = sphi 0, %s90
    %s93 = sphi 0, %s92
    %s107 = sphi 0, %s93
    %s111 = sphi 0, %s111
    %s113 = sphi 0, %s111
    %s114 = sphi 0, %s113
    %s128 = sphi 0, %s114
    %s132 = sphi 0, %s132
    %s134 = sphi 0, %s132
    %s135 = sphi 0, %s134
    %s149 = sphi 0, %s135
    %s155 = sphi 0, %s157
    %s158 = sphi 0, %s155
    %s159 = sphi 0, %s158
    %s175 = sphi 0, %s159
    %s181 = sphi 0, %s183
    %s184 = sphi 0, %s181
    %s185 = sphi 0, %s184
    %s201 = sphi 0, %s185
  $region4: #{resblock_pallas.2} parent=0 // loop_header_branch
    %17 = sbr.rel (%p15) target = $region8
  $region5: #{resblock_pallas.2} parent=0 // loop_body
    %s19 = ssub.s32 %s14, 1
    %s20 = ssub.s32 %s14, 2
    %s21 = sadd.s32 %s14, 1
    %s22 = ssub.s32 %s14, %s21
    %p23 = scmp.eq.s32.totalorder %s22, 0
    %s25 = sadd.s32 %s24, 1
    %s26 = scalar_select %p23, %s24, %s25
    %p29 = pneg %p23
    %p30 = scmp.eq.s32.totalorder %s14, 1
    %p31 = por %p29, %p30
    %p32 = scmp.ne.s32.totalorder %s24, %s27
    %p33 = scmp.eq.s32.totalorder %s14, 0
    %p34 = por %p32, %p33
    %p35 = scmp.ne.s32.totalorder %s24, %s27
    %p36 = scmp.eq.s32.totalorder %s19, 1
    %p37 = por %p35, %p36
    %p38 = scmp.ne.s32.totalorder %s27, %s28
    %p39 = scmp.eq.s32.totalorder %s19, 0
    %p40 = por %p38, %p39
    %p41 = scmp.ne.s32.totalorder %s27, %s28
    %p42 = scmp.eq.s32.totalorder %s20, 1
    %p43 = por %p41, %p42
    %p45 = scmp.ne.s32.totalorder %s28, %s44
    %p46 = scmp.eq.s32.totalorder %s20, 0
    %p47 = por %p45, %p46
    %s49 = sadd.s32 %s48, 1
    %p52 = scmp.eq.s32.totalorder %s14, 1
    %p53 = scmp.ne.s32.totalorder %s48, %s50
    %p54 = scmp.eq.s32.totalorder %s14, 0
    %p55 = por %p53, %p54
    %p56 = scmp.ne.s32.totalorder %s48, %s50
    %p57 = scmp.eq.s32.totalorder %s19, 1
    %p58 = por %p56, %p57
    %p59 = scmp.ne.s32.totalorder %s50, %s51
    %p60 = scmp.eq.s32.totalorder %s19, 0
    %p61 = por %p59, %p60
    %p62 = scmp.ne.s32.totalorder %s50, %s51
    %p63 = scmp.eq.s32.totalorder %s20, 1
    %p64 = por %p62, %p63
    %p66 = scmp.ne.s32.totalorder %s51, %s65
    %p67 = scmp.eq.s32.totalorder %s20, 0
    %p68 = por %p66, %p67
    %s70 = sadd.s32 %s69, 1
    %p73 = scmp.eq.s32.totalorder %s14, 1
    %p74 = scmp.ne.s32.totalorder %s69, %s71
    %p75 = scmp.eq.s32.totalorder %s14, 0
    %p76 = por %p74, %p75
    %p77 = scmp.ne.s32.totalorder %s69, %s71
    %p78 = scmp.eq.s32.totalorder %s19, 1
    %p79 = por %p77, %p78
    %p80 = scmp.ne.s32.totalorder %s71, %s72
    %p81 = scmp.eq.s32.totalorder %s19, 0
    %p82 = por %p80, %p81
    %p83 = scmp.ne.s32.totalorder %s71, %s72
    %p84 = scmp.eq.s32.totalorder %s20, 1
    %p85 = por %p83, %p84
    %p87 = scmp.ne.s32.totalorder %s72, %s86
    %p88 = scmp.eq.s32.totalorder %s20, 0
    %p89 = por %p87, %p88
    %s91 = sadd.s32 %s90, 1
    %p94 = scmp.eq.s32.totalorder %s14, 1
    %p95 = scmp.ne.s32.totalorder %s90, %s92
    %p96 = scmp.eq.s32.totalorder %s14, 0
    %p97 = por %p95, %p96
    %p98 = scmp.ne.s32.totalorder %s90, %s92
    %p99 = scmp.eq.s32.totalorder %s19, 1
    %p100 = por %p98, %p99
    %p101 = scmp.ne.s32.totalorder %s92, %s93
    %p102 = scmp.eq.s32.totalorder %s19, 0
    %p103 = por %p101, %p102
    %p104 = scmp.ne.s32.totalorder %s92, %s93
    %p105 = scmp.eq.s32.totalorder %s20, 1
    %p106 = por %p104, %p105
    %p108 = scmp.ne.s32.totalorder %s93, %s107
    %p109 = scmp.eq.s32.totalorder %s20, 0
    %p110 = por %p108, %p109
    %s112 = sadd.s32 %s111, 1
    %p115 = scmp.eq.s32.totalorder %s14, 1
    %p116 = scmp.ne.s32.totalorder %s111, %s113
    %p117 = scmp.eq.s32.totalorder %s14, 0
    %p118 = por %p116, %p117
    %p119 = scmp.ne.s32.totalorder %s111, %s113
    %p120 = scmp.eq.s32.totalorder %s19, 1
    %p121 = por %p119, %p120
    %p122 = scmp.ne.s32.totalorder %s113, %s114
    %p123 = scmp.eq.s32.totalorder %s19, 0
    %p124 = por %p122, %p123
    %p125 = scmp.ne.s32.totalorder %s113, %s114
    %p126 = scmp.eq.s32.totalorder %s20, 1
    %p127 = por %p125, %p126
    %p129 = scmp.ne.s32.totalorder %s114, %s128
    %p130 = scmp.eq.s32.totalorder %s20, 0
    %p131 = por %p129, %p130
    %s133 = sadd.s32 %s132, 1
    %p136 = scmp.eq.s32.totalorder %s14, 1
    %p137 = scmp.ne.s32.totalorder %s132, %s134
    %p138 = scmp.eq.s32.totalorder %s14, 0
    %p139 = por %p137, %p138
    %p140 = scmp.ne.s32.totalorder %s132, %s134
    %p141 = scmp.eq.s32.totalorder %s19, 1
    %p142 = por %p140, %p141
    %p143 = scmp.ne.s32.totalorder %s134, %s135
    %p144 = scmp.eq.s32.totalorder %s19, 0
    %p145 = por %p143, %p144
    %p146 = scmp.ne.s32.totalorder %s134, %s135
    %p147 = scmp.eq.s32.totalorder %s20, 1
    %p148 = por %p146, %p147
    %p150 = scmp.ne.s32.totalorder %s135, %s149
    %p151 = scmp.eq.s32.totalorder %s20, 0
    %p152 = por %p150, %p151
    %s153 = ssub.s32 %s14, %s21
    %p154 = scmp.eq.s32.totalorder %s153, 0
    %s156 = sadd.s32 %s155, 1
    %s157 = scalar_select %p154, %s155, %s156
    %p160 = pneg %p154
    %p161 = scmp.eq.s32.totalorder %s14, 1
    %p162 = por %p160, %p161
    %p163 = scmp.ne.s32.totalorder %s155, %s158
    %p164 = scmp.eq.s32.totalorder %s14, 0
    %p165 = por %p163, %p164
    %p166 = scmp.ne.s32.totalorder %s155, %s158
    %p167 = scmp.eq.s32.totalorder %s19, 1
    %p168 = por %p166, %p167
    %p169 = scmp.ne.s32.totalorder %s158, %s159
    %p170 = scmp.eq.s32.totalorder %s19, 0
    %p171 = por %p169, %p170
    %p172 = scmp.ne.s32.totalorder %s158, %s159
    %p173 = scmp.eq.s32.totalorder %s20, 1
    %p174 = por %p172, %p173
    %p176 = scmp.ne.s32.totalorder %s159, %s175
    %p177 = scmp.eq.s32.totalorder %s20, 0
    %p178 = por %p176, %p177
    %s179 = ssub.s32 %s14, %s21
    %p180 = scmp.eq.s32.totalorder %s179, 0
    %s182 = sadd.s32 %s181, 1
    %s183 = scalar_select %p180, %s181, %s182
    %p186 = pneg %p180
    %p187 = scmp.eq.s32.totalorder %s14, 1
    %p188 = por %p186, %p187
    %p189 = scmp.ne.s32.totalorder %s181, %s184
    %p190 = scmp.eq.s32.totalorder %s14, 0
    %p191 = por %p189, %p190
    %p192 = scmp.ne.s32.totalorder %s181, %s184
    %p193 = scmp.eq.s32.totalorder %s19, 1
    %p194 = por %p192, %p193
    %p195 = scmp.ne.s32.totalorder %s184, %s185
    %p196 = scmp.eq.s32.totalorder %s19, 0
    %p197 = por %p195, %p196
    %p198 = scmp.ne.s32.totalorder %s184, %s185
    %p199 = scmp.eq.s32.totalorder %s20, 1
    %p200 = por %p198, %p199
    %p202 = scmp.ne.s32.totalorder %s185, %s201
    %p203 = scmp.eq.s32.totalorder %s20, 0
    %p204 = por %p202, %p203
    %p205 = scmp.le.s32.totalorder 1, %s14
    %p206 = scmp.lt.s32.totalorder %s14, 3
    %p207 = pnand %p205, %p206
    %p208 = pneg %p207
    // Predicated region
    $region9: #{resblock_pallas.2} parent=5 // pred_check
      _
    $region10: #{resblock_pallas.2} parent=5 // pred_check_branch
      %210 = sbr.rel (%p207) target = $region12
    $region11: #{resblock_pallas.2} parent=5 // pred_region
      %s211 = ssub.s32 %s14, 1
      // Predicated region
      $region13: #{resblock_pallas.2} parent=11 // pred_check
        %p212 = pneg %p61
      $region14: #{resblock_pallas.2} parent=11 // pred_check_branch
        %214 = sbr.rel (%p212) target = $region16
      $region15: #{resblock_pallas.2} parent=11 // pred_region
        _
      $region16: #{resblock_pallas.2} parent=11 // pred_fallthru
        _
      // Predicated region
      $region17: #{resblock_pallas.2} parent=11 // pred_check
        %p215 = pneg %p82
      $region18: #{resblock_pallas.2} parent=11 // pred_check_branch
        %217 = sbr.rel (%p215) target = $region20
      $region19: #{resblock_pallas.2} parent=11 // pred_region
        _
      $region20: #{resblock_pallas.2} parent=11 // pred_fallthru
        _
      // Predicated region
      $region21: #{resblock_pallas.2} parent=11 // pred_check
        %p218 = pneg %p103
      $region22: #{resblock_pallas.2} parent=11 // pred_check_branch
        %220 = sbr.rel (%p218) target = $region24
      $region23: #{resblock_pallas.2} parent=11 // pred_region
        _
      $region24: #{resblock_pallas.2} parent=11 // pred_fallthru
        _
      // Predicated region
      $region25: #{resblock_pallas.2} parent=11 // pred_check
        %p221 = pneg %p124
      $region26: #{resblock_pallas.2} parent=11 // pred_check_branch
        %223 = sbr.rel (%p221) target = $region28
      $region27: #{resblock_pallas.2} parent=11 // pred_region
        _
      $region28: #{resblock_pallas.2} parent=11 // pred_fallthru
        _
      // Predicated region
      $region29: #{resblock_pallas.2} parent=11 // pred_check
        %p224 = pneg %p145
      $region30: #{resblock_pallas.2} parent=11 // pred_check_branch
        %226 = sbr.rel (%p224) target = $region32
      $region31: #{resblock_pallas.2} parent=11 // pred_region
        _
      $region32: #{resblock_pallas.2} parent=11 // pred_fallthru
        _
    $region12: #{resblock_pallas.2} parent=5 // pred_fallthru
      _
    %p227 = scmp.lt.s32.totalorder %s14, 2
    // Predicated region
    $region33: #{resblock_pallas.2} parent=5 // pred_check
      %p228 = pneg %p227
    $region34: #{resblock_pallas.2} parent=5 // pred_check_branch
      %230 = sbr.rel (%p228) target = $region36
    $region35: #{resblock_pallas.2} parent=5 // pred_region
      // Predicated region
      $region37: #{resblock_pallas.2} parent=35 // pred_check
        %p231 = pneg %p34
      $region38: #{resblock_pallas.2} parent=35 // pred_check_branch
        %233 = sbr.rel (%p231) target = $region40
      $region39: #{resblock_pallas.2} parent=35 // pred_region
        %p234 = scmp.lt.s32.totalorder %s14, 1
        %s235 = scalar_select %p234, %s14, 1
        %s236 = smul.addr %s235, 2
        %s237 = smul.addr %s236, 4
        %s238 = scalar_lea.vmem %s0, %s237
      $region40: #{resblock_pallas.2} parent=35 // pred_fallthru
        _
    $region36: #{resblock_pallas.2} parent=5 // pred_fallthru
      _
    %p239 = scmp.le.s32.totalorder 1, %s14
    %p240 = scmp.lt.s32.totalorder %s14, 3
    %p241 = pnand %p239, %p240
    %p242 = pneg %p241
    // Predicated region
    $region41: #{resblock_pallas.2} parent=5 // pred_check
      _
    $region42: #{resblock_pallas.2} parent=5 // pred_check_branch
      %244 = sbr.rel (%p241) target = $region44
    $region43: #{resblock_pallas.2} parent=5 // pred_region
      %s245 = ssub.s32 %s14, 1
      %p246 = scmp.lt.s32.totalorder %s19, 1
      %s247 = scalar_select %p246, %s19, 1
      %s248 = smul.addr %s247, 2
      %s249 = smul.addr %s248, 4
      %s250 = scalar_lea.vmem %s0, %s249
      %p251 = pneg %p40
      %p252 = pneg %p37
      %p253 = pneg %p61
      %p254 = pneg %p58
      %p255 = pneg %p82
      %p256 = pneg %p79
      %p257 = pneg %p103
      %p258 = pneg %p100
      %p259 = pneg %p124
      %p260 = pneg %p121
      %p261 = pneg %p145
      %p262 = pneg %p142
      %p263 = pneg %p171
      %p264 = pneg %p168
      %p265 = scmp.lt.s32.totalorder %s19, 1
      %s266 = scalar_select %p265, %s19, 1
      %s267 = smul.addr %s266, 2
      %s268 = smul.addr %s267, 4
      %s269 = scalar_lea.vmem %s6, %s268
      %p270 = pneg %p197
      %p271 = pneg %p194
      %p272 = scmp.lt.s32.totalorder %s19, 1
      %s273 = scalar_select %p272, %s19, 1
      %s274 = smul.addr %s273, 4
      %s275 = scalar_lea.vmem %s7, %s274
      %p276 = scmp.lt.s32.totalorder %s19, 1
      %s277 = scalar_select %p276, %s19, 1
      %s278 = smul.addr %s277, 2
      %s279 = smul.addr %s278, 4
      %s280 = scalar_lea.vmem %s0, %s279
      %p281 = scmp.lt.s32.totalorder %s19, 1
      %s282 = scalar_select %p281, %s19, 1
      %s283 = smul.addr %s282, 2
      %s284 = smul.addr %s283, 4
      %s285 = scalar_lea.vmem %s6, %s284
      %p286 = scmp.lt.s32.totalorder %s19, 1
      %s287 = scalar_select %p286, %s19, 1
      %s288 = smul.addr %s287, 4
      %s289 = scalar_lea.vmem %s7, %s288
      %v291 = vld [vmem:[%s280] sm:$0xff]
      %293 = vst [vmem:[#allocation1] ss:$2 sm:$0xff] %v291
      %v294 = vld.sshfl [vmem:[#allocation1] sm:$0xff pattern:$0x75316420]
      %v295 = vld.sshfl [vmem:[#allocation1 + $0x8] sm:$0xff pattern:$0x75316420]
      %v298 = vpack.c.bf16 %v295, %v294
      %v300 = vunpack.c.l.b16 %v298
      %v301 = vunpack.c.h.b16 %v298
      %v302 = vpack.c.b16 %v300, %v300
      %v303 = vpack.c.b16 %v301, %v301
      %304 = vrot.lane.b32.xlu0 %v302, 17
      %v305 = vpop.permute.xlu0 %304
      %306 = vrot.lane.b32.xlu0 %v303, 17
      %v307 = vpop.permute.xlu0 %306
      %vm308 = vcmask 138240
      %v309 = vsel %vm308, %v305, %v307
      %vm311 = vcmask 138240
      %v314 = vsel %vm311, 0, %v305
      %v317 = vsel %vm311, %v307, 0
      %v319 = vld [vmem:[%s1] sm:$0x7]
      %321 = vst [vmem:[#allocation1] ss:$9 sm:$0xff] %v319
      %v322 = vld [vmem:[#allocation1] sm:$0xff]
      %v323 = vld [vmem:[#allocation1 + $0x9] sm:$0xff]
      %v324 = vld [vmem:[#allocation1 + $0x12] sm:$0xff]
      %v325 = vpack.i.b16 %v322, %v322
      %v327 = vperm.slane %v325, 0
      %v328 = vpack.i.b16 %v323, %v323
      %v330 = vperm.slane %v328, 0
      %v331 = vpack.i.b16 %v324, %v324
      %v333 = vperm.slane %v331, 0
      %v334 = vunpack.c.l.bf16 %v314
      %v335 = vunpack.c.l.bf16 %v309
      %v336 = vunpack.c.l.bf16 %v317
      %v337 = vunpack.c.l.bf16 %v327
      %v338 = vunpack.c.l.bf16 %v330
      %v339 = vunpack.c.l.bf16 %v333
      %v340 = vmul.f32 %v334, %v337
      %v341 = vmul.f32 %v335, %v338
      %v342 = vmul.f32 %v336, %v339
      %v343 = vpack.c.bf16 %v341, %v340
      %v344 = vpack.c.bf16 %v342, %v342
      %v345 = vld [vmem:[%s1] sm:$0x7]
      %347 = vst [vmem:[#allocation1] ss:$9 sm:$0xff] %v345
      %v348 = vld [vmem:[#allocation1] sm:$0xff]
      %v349 = vld [vmem:[#allocation1 + $0x9] sm:$0xff]
      %v350 = vld [vmem:[#allocation1 + $0x12] sm:$0xff]
      %v351 = vshrl.u32 %v348, 16
      %v352 = vpack.i.b16 %v351, %v351
      %v354 = vperm.slane %v352, 0
      %v355 = vshrl.u32 %v349, 16
      %v356 = vpack.i.b16 %v355, %v355
      %v358 = vperm.slane %v356, 0
      %v359 = vshrl.u32 %v350, 16
      %v360 = vpack.i.b16 %v359, %v359
      %v362 = vperm.slane %v360, 0
      %v363 = vunpack.c.l.bf16 %v354
      %v364 = vunpack.c.l.bf16 %v358
      %v365 = vunpack.c.l.bf16 %v362
      %v366 = vmul.f32 %v334, %v363
      %v367 = vmul.f32 %v335, %v364
      %v368 = vmul.f32 %v336, %v365
      %v369 = vpack.c.bf16 %v367, %v366
      %v370 = vpack.c.bf16 %v368, %v368
      %v372 = vunpack.c.l.b16 %v343
      %v373 = vunpack.c.h.b16 %v343
      %v374 = vpack.c.b16 %v372, %v372
      %v375 = vpack.c.b16 %v373, %v373
      %v378 = vrot.slane %v314, 6
      %v379 = vrot.slane %v309, 6
      %v380 = vrot.slane %v317, 6
      %381 = vrot.lane.b32.xlu0 %v378, 127
      %v382 = vpop.permute.xlu0 %381
      %383 = vrot.lane.b32.xlu0 %v379, 127
      %v384 = vpop.permute.xlu0 %383
      %385 = vrot.lane.b32.xlu0 %v380, 127
      %v386 = vpop.permute.xlu0 %385
      %vm387 = vcmask 1039360
      %v388 = vsel %vm387, %v382, %v384
      %v389 = vsel %vm387, %v384, %v386
      %v392 = vunpack.c.l.b16 %v369
      %v393 = vunpack.c.h.b16 %v369
      %v394 = vunpack.c.l.b16 %v370
      %v395 = vpack.c.b16 %v392, %v392
      %v396 = vpack.c.b16 %v393, %v393
      %v397 = vpack.c.b16 %v394, %v394
      %398 = vrot.lane.b32.xlu0 %v395, 126
      %v399 = vpop.permute.xlu0 %398
      %400 = vrot.lane.b32.xlu0 %v396, 126
      %v401 = vpop.permute.xlu0 %400
      %402 = vrot.lane.b32.xlu0 %v397, 126
      %v403 = vpop.permute.xlu0 %402
      %vm404 = vcmask 1031168
      %v405 = vsel %vm404, %v399, %v401
      %v406 = vsel %vm404, %v401, %v403
      %v408 = vunpack.c.l.b16 %v344
      %v409 = vpack.c.b16 %v408, %v408
      %v410 = vrot.slane %v374, 2
      %v411 = vrot.slane %v375, 2
      %v412 = vrot.slane %v409, 2
      %413 = vrot.lane.b32.xlu0 %v410, 112
      %v414 = vpop.permute.xlu0 %413
      %415 = vrot.lane.b32.xlu0 %v411, 112
      %v416 = vpop.permute.xlu0 %415
      %417 = vrot.lane.b32.xlu0 %v412, 112
      %v418 = vpop.permute.xlu0 %417
      %vm419 = vcmask 916480
      %v420 = vsel %vm419, %v414, %v416
      %v421 = vsel %vm419, %v416, %v418
      %422 = vrot.lane.b32.xlu0 %v314, 111
      %v423 = vpop.permute.xlu0 %422
      %424 = vrot.lane.b32.xlu0 %v309, 111
      %v425 = vpop.permute.xlu0 %424
      %426 = vrot.lane.b32.xlu0 %v317, 111
      %v427 = vpop.permute.xlu0 %426
      %vm428 = vcmask 908288
      %v429 = vsel %vm428, %v423, %v425
      %v430 = vsel %vm428, %v425, %v427
      %v431 = vrot.slane %v395, 6
      %v432 = vrot.slane %v396, 6
      %v433 = vrot.slane %v397, 6
      %434 = vrot.lane.b32.xlu0 %v431, 110
      %v435 = vpop.permute.xlu0 %434
      %436 = vrot.lane.b32.xlu0 %v432, 110
      %v437 = vpop.permute.xlu0 %436
      %438 = vrot.lane.b32.xlu0 %v433, 110
      %v439 = vpop.permute.xlu0 %438
      %vm440 = vcmask 900096
      %v441 = vsel %vm440, %v435, %v437
      %v442 = vsel %vm440, %v437, %v439
      %443 = vrot.lane.b32.xlu0 %v374, 96
      %v444 = vpop.permute.xlu0 %443
      %445 = vrot.lane.b32.xlu0 %v375, 96
      %v446 = vpop.permute.xlu0 %445
      %447 = vrot.lane.b32.xlu0 %v409, 96
      %v448 = vpop.permute.xlu0 %447
      %vm449 = vcmask 785408
      %v450 = vsel %vm449, %v444, %v446
      %v451 = vsel %vm449, %v446, %v448
      %v452 = vrot.slane %v314, 2
      %v453 = vrot.slane %v309, 2
      %v454 = vrot.slane %v317, 2
      %455 = vrot.lane.b32.xlu0 %v452, 95
      %v456 = vpop.permute.xlu0 %455
      %457 = vrot.lane.b32.xlu0 %v453, 95
      %v458 = vpop.permute.xlu0 %457
      %459 = vrot.lane.b32.xlu0 %v454, 95
      %v460 = vpop.permute.xlu0 %459
      %vm461 = vcmask 777216
      %v462 = vsel %vm461, %v456, %v458
      %v463 = vsel %vm461, %v458, %v460
      %464 = vrot.lane.b32.xlu0 %v395, 94
      %v465 = vpop.permute.xlu0 %464
      %466 = vrot.lane.b32.xlu0 %v396, 94
      %v467 = vpop.permute.xlu0 %466
      %468 = vrot.lane.b32.xlu0 %v397, 94
      %v469 = vpop.permute.xlu0 %468
      %vm470 = vcmask 769024
      %v471 = vsel %vm470, %v465, %v467
      %v472 = vsel %vm470, %v467, %v469
      %vm473 = vcmask 1041408
      %v476 = vsel %vm473, %v374, %v388
      %v479 = vsel %vm473, %v375, %v389
      %vm480 = vcmask 1043456
      %v482 = vsel %vm480, %v476, %v405
      %v484 = vsel %vm480, %v479, %v406
      %vm485 = vcmask 1045504
      %v487 = vsel %vm485, %v482, %v420
      %v490 = vsel %vm485, %v484, %v421
      %v494 = vsel %vm473, %v429, %v441
      %v497 = vsel %vm473, %v430, %v442
      %v499 = vsel %vm480, %v494, %v450
      %v501 = vsel %vm480, %v497, %v451
      %v503 = vsel %vm485, %v499, %v462
      %v506 = vsel %vm485, %v501, %v463
      %v508 = vld [vmem:[%s2] sm:$0x1]
      %v509 = vld [vmem:[%s3] sm:$0x3]
      %511 = vset.pattern.permute.xlu0 0
      %512 = vperm.xlu0 %511, %v509
      %v513 = vpop.permute.xlu0 %512
      %vm515 = vcmask 293888
      %v517 = vsel %vm515, %v508, 0
      %v520 = vsel %vm473, %v471, 0
      %v523 = vsel %vm473, %v472, 0
      %525 = vmatpush.bf16.msra.mxu0 0
      %526 = vmatpush.bf16.msra.mxu0 0
      %527 = vmatpush.bf16.msra.mxu0 0
      %528 = vmatpush.bf16.msra.mxu0 0
      %529 = vmatpush.bf16.msra.mxu0 0
      %530 = vmatpush.bf16.msra.mxu0 %v520
      %531 = vmatpush.bf16.msra.mxu0 %v503
      %532 = vmatpush.bf16.msra.mxu0 %v487
      %533 = vmatmul.bf16.gmra.mxu0 %v517
      %v534 = vpop.f32.mrf.mxu0
      %v535 = vadd.f32 %v513, %v534
      %v536 = vpop.f32.mrf.mxu0
      %537 = vdwg.mxu0
      %538 = vmatpush.bf16.msra.mxu0 0
      %539 = vmatpush.bf16.msra.mxu0 0
      %540 = vmatpush.bf16.msra.mxu0 0
      %541 = vmatpush.bf16.msra.mxu0 0
      %542 = vmatpush.bf16.msra.mxu0 0
      %543 = vmatpush.bf16.msra.mxu0 %v523
      %544 = vmatpush.bf16.msra.mxu0 %v506
      %545 = vmatpush.bf16.msra.mxu0 %v490
      %546 = vmatmul.bf16.gmra.mxu0 %v517
      %v547 = vpop.f32.mrf.mxu0
      %v548 = vadd.f32 %v513, %v547
      %v549 = vpop.f32.mrf.mxu0
      %550 = vdwg.mxu0
      %v551 = vmax.f32 %v535, 0.0
      %v552 = vmax.f32 %v548, 0.0
      %v553 = vpack.c.bf16 %v552, %v551
      %v555 = vunpack.c.l.b16 %v553
      %v556 = vunpack.c.h.b16 %v553
      %v557 = vpack.c.b16 %v555, %v555
      %v558 = vpack.c.b16 %v556, %v556
      %559 = vrot.lane.b32.xlu0 %v557, 17
      %v560 = vpop.permute.xlu0 %559
      %561 = vrot.lane.b32.xlu0 %v558, 17
      %v562 = vpop.permute.xlu0 %561
      %v563 = vsel %vm308, %v560, %v562
      %v566 = vsel %vm311, 0, %v560
      %v569 = vsel %vm311, %v562, 0
      %571 = vst [vmem:[#allocation1] ss:$9 sm:$0xff] %v319
      %v572 = vld [vmem:[#allocation1] sm:$0xff]
      %v573 = vld [vmem:[#allocation1 + $0x9] sm:$0xff]
      %v574 = vld [vmem:[#allocation1 + $0x12] sm:$0xff]
      %v575 = vpack.i.b16 %v572, %v572
      %v577 = vperm.slane %v575, 0
      %v578 = vpack.i.b16 %v573, %v573
      %v580 = vperm.slane %v578, 0
      %v581 = vpack.i.b16 %v574, %v574
      %v583 = vperm.slane %v581, 0
      %v584 = vunpack.c.l.bf16 %v566
      %v585 = vunpack.c.l.bf16 %v563
      %v586 = vunpack.c.l.bf16 %v569
      %v587 = vunpack.c.l.bf16 %v577
      %v588 = vunpack.c.l.bf16 %v580
      %v589 = vunpack.c.l.bf16 %v583
      %v590 = vmul.f32 %v584, %v587
      %v591 = vmul.f32 %v585, %v588
      %v592 = vmul.f32 %v586, %v589
      %v593 = vpack.c.bf16 %v591, %v590
      %v594 = vpack.c.bf16 %v592, %v592
      %595 = vst [vmem:[#allocation1] ss:$9 sm:$0xff] %v345
      %v596 = vld [vmem:[#allocation1] sm:$0xff]
      %v597 = vld [vmem:[#allocation1 + $0x9] sm:$0xff]
      %v598 = vld [vmem:[#allocation1 + $0x12] sm:$0xff]
      %v599 = vshrl.u32 %v596, 16
      %v600 = vpack.i.b16 %v599, %v599
      %v602 = vperm.slane %v600, 0
      %v603 = vshrl.u32 %v597, 16
      %v604 = vpack.i.b16 %v603, %v603
      %v606 = vperm.slane %v604, 0
      %v607 = vshrl.u32 %v598, 16
      %v608 = vpack.i.b16 %v607, %v607
      %v610 = vperm.slane %v608, 0
      %v611 = vunpack.c.l.bf16 %v602
      %v612 = vunpack.c.l.bf16 %v606
      %v613 = vunpack.c.l.bf16 %v610
      %v614 = vmul.f32 %v584, %v611
      %v615 = vmul.f32 %v585, %v612
      %v616 = vmul.f32 %v586, %v613
      %v617 = vpack.c.bf16 %v615, %v614
      %v618 = vpack.c.bf16 %v616, %v616
      %v620 = vunpack.c.l.b16 %v593
      %v621 = vunpack.c.h.b16 %v593
      %v622 = vpack.c.b16 %v620, %v620
      %v623 = vpack.c.b16 %v621, %v621
      %v626 = vrot.slane %v566, 7
      %v627 = vrot.slane %v563, 7
      %v628 = vrot.slane %v569, 7
      %629 = vrot.lane.b32.xlu0 %v626, 127
      %v630 = vpop.permute.xlu0 %629
      %631 = vrot.lane.b32.xlu0 %v627, 127
      %v632 = vpop.permute.xlu0 %631
      %633 = vrot.lane.b32.xlu0 %v628, 127
      %v634 = vpop.permute.xlu0 %633
      %v635 = vsel %vm387, %v630, %v632
      %v636 = vsel %vm387, %v632, %v634
      %v639 = vunpack.c.l.b16 %v617
      %v640 = vunpack.c.h.b16 %v617
      %v641 = vunpack.c.l.b16 %v618
      %v642 = vpack.c.b16 %v639, %v639
      %v643 = vpack.c.b16 %v640, %v640
      %v644 = vpack.c.b16 %v641, %v641
      %v645 = vrot.slane %v642, 6
      %v646 = vrot.slane %v643, 6
      %v647 = vrot.slane %v644, 6
      %648 = vrot.lane.b32.xlu0 %v645, 126
      %v649 = vpop.permute.xlu0 %648
      %650 = vrot.lane.b32.xlu0 %v646, 126
      %v651 = vpop.permute.xlu0 %650
      %652 = vrot.lane.b32.xlu0 %v647, 126
      %v653 = vpop.permute.xlu0 %652
      %v654 = vsel %vm404, %v649, %v651
      %v655 = vsel %vm404, %v651, %v653
      %v657 = vunpack.c.l.b16 %v594
      %v658 = vpack.c.b16 %v657, %v657
      %v659 = vrot.slane %v622, 5
      %v660 = vrot.slane %v623, 5
      %v661 = vrot.slane %v658, 5
      %662 = vrot.lane.b32.xlu0 %v659, 112
      %v663 = vpop.permute.xlu0 %662
      %664 = vrot.lane.b32.xlu0 %v660, 112
      %v665 = vpop.permute.xlu0 %664
      %666 = vrot.lane.b32.xlu0 %v661, 112
      %v667 = vpop.permute.xlu0 %666
      %v668 = vsel %vm419, %v663, %v665
      %v669 = vsel %vm419, %v665, %v667
      %v670 = vrot.slane %v566, 4
      %v671 = vrot.slane %v563, 4
      %v672 = vrot.slane %v569, 4
      %673 = vrot.lane.b32.xlu0 %v670, 111
      %v674 = vpop.permute.xlu0 %673
      %675 = vrot.lane.b32.xlu0 %v671, 111
      %v676 = vpop.permute.xlu0 %675
      %677 = vrot.lane.b32.xlu0 %v672, 111
      %v678 = vpop.permute.xlu0 %677
      %v679 = vsel %vm428, %v674, %v676
      %v680 = vsel %vm428, %v676, %v678
      %v681 = vrot.slane %v642, 3
      %v682 = vrot.slane %v643, 3
      %v683 = vrot.slane %v644, 3
      %684 = vrot.lane.b32.xlu0 %v681, 110
      %v685 = vpop.permute.xlu0 %684
      %686 = vrot.lane.b32.xlu0 %v682, 110
      %v687 = vpop.permute.xlu0 %686
      %688 = vrot.lane.b32.xlu0 %v683, 110
      %v689 = vpop.permute.xlu0 %688
      %v690 = vsel %vm440, %v685, %v687
      %v691 = vsel %vm440, %v687, %v689
      %v692 = vrot.slane %v622, 2
      %v693 = vrot.slane %v623, 2
      %v694 = vrot.slane %v658, 2
      %695 = vrot.lane.b32.xlu0 %v692, 96
      %v696 = vpop.permute.xlu0 %695
      %697 = vrot.lane.b32.xlu0 %v693, 96
      %v698 = vpop.permute.xlu0 %697
      %699 = vrot.lane.b32.xlu0 %v694, 96
      %v700 = vpop.permute.xlu0 %699
      %v701 = vsel %vm449, %v696, %v698
      %v702 = vsel %vm449, %v698, %v700
      %v703 = vrot.slane %v566, 1
      %v704 = vrot.slane %v563, 1
      %v705 = vrot.slane %v569, 1
      %706 = vrot.lane.b32.xlu0 %v703, 95
      %v707 = vpop.permute.xlu0 %706
      %708 = vrot.lane.b32.xlu0 %v704, 95
      %v709 = vpop.permute.xlu0 %708
      %710 = vrot.lane.b32.xlu0 %v705, 95
      %v711 = vpop.permute.xlu0 %710
      %v712 = vsel %vm461, %v707, %v709
      %v713 = vsel %vm461, %v709, %v711
      %714 = vrot.lane.b32.xlu0 %v642, 94
      %v715 = vpop.permute.xlu0 %714
      %716 = vrot.lane.b32.xlu0 %v643, 94
      %v717 = vpop.permute.xlu0 %716
      %718 = vrot.lane.b32.xlu0 %v644, 94
      %v719 = vpop.permute.xlu0 %718
      %v720 = vsel %vm470, %v715, %v717
      %v721 = vsel %vm470, %v717, %v719
      %vm722 = vcmask 1040384
      %v725 = vsel %vm722, %v622, %v635
      %v728 = vsel %vm722, %v623, %v636
      %v730 = vsel %vm473, %v725, %v654
      %v732 = vsel %vm473, %v728, %v655
      %vm733 = vcmask 1042432
      %v735 = vsel %vm733, %v730, %v668
      %v737 = vsel %vm733, %v732, %v669
      %v739 = vsel %vm480, %v735, %v679
      %v741 = vsel %vm480, %v737, %v680
      %vm742 = vcmask 1044480
      %v744 = vsel %vm742, %v739, %v690
      %v746 = vsel %vm742, %v741, %v691
      %v748 = vsel %vm485, %v744, %v701
      %v750 = vsel %vm485, %v746, %v702
      %vm751 = vcmask 1046528
      %v753 = vsel %vm751, %v748, %v712
      %v756 = vsel %vm751, %v750, %v713
      %v758 = vld [vmem:[%s4] sm:$0x3]
      %v759 = vld [vmem:[%s5] sm:$0xf]
      %761 = vset.pattern.permute.xlu0 0
      %762 = vperm.xlu0 %761, %v759
      %v763 = vpop.permute.xlu0 %762
      %vm765 = vcmask 146432
      %v767 = vsel %vm765, %v758, 0
      %v770 = vsel %vm722, %v720, 0
      %v773 = vsel %vm722, %v721, 0
      %775 = vmatpush.bf16.msra.mxu0 0
      %776 = vmatpush.bf16.msra.mxu0 0
      %777 = vmatpush.bf16.msra.mxu0 0
      %778 = vmatpush.bf16.msra.mxu0 0
      %779 = vmatpush.bf16.msra.mxu0 0
      %780 = vmatpush.bf16.msra.mxu0 0
      %781 = vmatpush.bf16.msra.mxu0 %v770
      %782 = vmatpush.bf16.msra.mxu0 %v753
      %783 = vmatmul.bf16.gmra.mxu0 %v767
      %v784 = vpop.f32.mrf.mxu0
      %v785 = vadd.f32 %v763, %v784
      %v786 = vpop.f32.mrf.mxu0
      %787 = vdwg.mxu0
      %788 = vmatpush.bf16.msra.mxu0 0
      %789 = vmatpush.bf16.msra.mxu0 0
      %790 = vmatpush.bf16.msra.mxu0 0
      %791 = vmatpush.bf16.msra.mxu0 0
      %792 = vmatpush.bf16.msra.mxu0 0
      %793 = vmatpush.bf16.msra.mxu0 0
      %794 = vmatpush.bf16.msra.mxu0 %v773
      %795 = vmatpush.bf16.msra.mxu0 %v756
      %796 = vmatmul.bf16.gmra.mxu0 %v767
      %v797 = vpop.f32.mrf.mxu0
      %v798 = vadd.f32 %v763, %v797
      %v799 = vpop.f32.mrf.mxu0
      %800 = vdwg.mxu0
      %v803 = vrot.slane %v798, 4
      %v804 = vsel %vm480, %v785, %v803
      %806 = vst [vmem:[%s285] sm:$0xff] %v804
      %v807 = vsel %vm480, %v785, 0.0
      %v808 = vsel %vm480, %v798, 0.0
      %v809 = vadd.f32 %v807, %v808
      %810 = vadd.xlane.f32.xlu0 %v809
      %v811 = vpop.xlane.xlu0 %810
      %v812 = vmul.f32 %v785, %v785
      %v813 = vmul.f32 %v798, %v798
      %v814 = vsel %vm480, %v812, 0.0
      %v815 = vsel %vm480, %v813, 0.0
      %v816 = vadd.f32 %v814, %v815
      %817 = vadd.xlane.f32.xlu0 %v816
      %v818 = vpop.xlane.xlu0 %817
      %vm819 = vcmask 7168
      %v820 = vsel %vm819, %v811, %v818
      %vm821 = vcmask 11264
      %822 = vst.msk [vmem:[%s289] sm:$0xf] %vm821, %v820
      %p823 = scmp.lt.s32.totalorder %s19, 1
      %s824 = scalar_select %p823, %s19, 1
      %s825 = smul.addr %s824, 2
      %s826 = smul.addr %s825, 4
      %s827 = scalar_lea.vmem %s6, %s826
      %p828 = scmp.lt.s32.totalorder %s19, 1
      %s829 = scalar_select %p828, %s19, 1
      %s830 = smul.addr %s829, 4
      %s831 = scalar_lea.vmem %s7, %s830
      // Predicated region
      $region45: #{resblock_pallas.2} parent=43 // pred_check
        %p832 = pneg %p168
      $region46: #{resblock_pallas.2} parent=43 // pred_check_branch
        %834 = sbr.rel (%p832) target = $region48
      $region47: #{resblock_pallas.2} parent=43 // pred_region
        _
      $region48: #{resblock_pallas.2} parent=43 // pred_fallthru
        _
      // Predicated region
      $region49: #{resblock_pallas.2} parent=43 // pred_check
        %p835 = pneg %p194
      $region50: #{resblock_pallas.2} parent=43 // pred_check_branch
        %837 = sbr.rel (%p835) target = $region52
      $region51: #{resblock_pallas.2} parent=43 // pred_region
        _
      $region52: #{resblock_pallas.2} parent=43 // pred_fallthru
        _
    $region44: #{resblock_pallas.2} parent=5 // pred_fallthru
      _
    %p838 = scmp.le.s32.totalorder 2, %s14
    // Predicated region
    $region53: #{resblock_pallas.2} parent=5 // pred_check
      %p839 = pneg %p838
    $region54: #{resblock_pallas.2} parent=5 // pred_check_branch
      %841 = sbr.rel (%p839) target = $region56
    $region55: #{resblock_pallas.2} parent=5 // pred_region
      %s842 = ssub.s32 %s14, 2
      // Predicated region
      $region57: #{resblock_pallas.2} parent=55 // pred_check
        %p843 = pneg %p174
      $region58: #{resblock_pallas.2} parent=55 // pred_check_branch
        %845 = sbr.rel (%p843) target = $region60
      $region59: #{resblock_pallas.2} parent=55 // pred_region
        %p846 = scmp.lt.s32.totalorder %s20, 1
        %s847 = scalar_select %p846, %s20, 1
        %s848 = smul.addr %s847, 2
        %s849 = smul.addr %s848, 4
        %s850 = scalar_lea.vmem %s6, %s849
      $region60: #{resblock_pallas.2} parent=55 // pred_fallthru
        _
      // Predicated region
      $region61: #{resblock_pallas.2} parent=55 // pred_check
        %p851 = pneg %p200
      $region62: #{resblock_pallas.2} parent=55 // pred_check_branch
        %853 = sbr.rel (%p851) target = $region64
      $region63: #{resblock_pallas.2} parent=55 // pred_region
        %p854 = scmp.lt.s32.totalorder %s20, 1
        %s855 = scalar_select %p854, %s20, 1
        %s856 = smul.addr %s855, 4
        %s857 = scalar_lea.vmem %s7, %s856
      $region64: #{resblock_pallas.2} parent=55 // pred_fallthru
        _
    $region56: #{resblock_pallas.2} parent=5 // pred_fallthru
      _
  $region6: #{resblock_pallas.2} parent=0 // loop_footer
    %s18 = sadd.s32 1, %s14
  $region7: #{resblock_pallas.2} parent=0 // loop_footer_branch
    %13 = sbr.rel target = $region3
  $region8: #{resblock_pallas.2} parent=0 // loop_exit
    _

</llo_original>
